<compile_context>
chip_gen: v7x
topology: tpu7x:2x2x1
jax: 0.10.0
libtpu: 0.0.40
codegen_flags: <defaults>
</compile_context>

<pallas_src>
import functools

import jax
import jax.numpy as jnp
from jax.experimental import pallas as pl
from jax.experimental.pallas import tpu as pltpu

MXU_DTYPE = jnp.bfloat16  # MXU operand dtype; elementwise math stays f32.


def _round_up(n, m):
    return ((n + m - 1) // m) * m


def _conditional_uniform_kernel(x_ref, w1_ref, b1_ref, wh_ref, bh_ref,
                                out_ref, *, z_pad):
    # --- net: Linear + ReLU (f32 accumulation, f32 elementwise) -------------
    h = jnp.dot(x_ref[...], w1_ref[...], preferred_element_type=jnp.float32)
    h = jnp.maximum(h + b1_ref[...], 0.0)

    # --- fused center|radius head: one MXU pass over (hidden, 2*z_pad) ------
    y = jnp.dot(h.astype(wh_ref.dtype), wh_ref[...],
                preferred_element_type=jnp.float32)
    y = y + bh_ref[...]

    c = jnp.tanh(y[:, :z_pad])           # center half (tile-aligned slice)
    r = jax.nn.sigmoid(y[:, z_pad:])     # radius half

    # Two direct 128-aligned stores into the lane-dense packed output
    # [ left | right ] -- avoids materializing a concat temp.
    out_ref[:, :z_pad] = jnp.clip(c - r, -1.0, 1.0).astype(out_ref.dtype)
    out_ref[:, z_pad:] = jnp.clip(c + r, -1.0, 1.0).astype(out_ref.dtype)


def _forward_padded(x, w1_p, b1_p, wh_p, bh_p, *, in_dim, hid_p, z_dim, z_p,
                    block_batch):
    """Forward on pre-padded (bf16) weights. Only x is cast/padded per call."""
    batch = x.shape[0]

    # Tile count: minimize overshoot, and use >= 2 steps for batch >= 16 so
    # the "parallel" grid axis can shard across v7x's two TensorCores.
    min_steps = 2 if batch >= 16 else 1
    n_steps = max(pl.cdiv(batch, block_batch), min_steps)
    tb = _round_up(pl.cdiv(batch, n_steps), 8)       # batch tile, multiple of 8
    batch_p = tb * n_steps

    x_b = x.astype(MXU_DTYPE)                        # no in_dim padding
    if batch_p != batch:
        x_b = jnp.pad(x_b, ((0, batch_p - batch), (0, 0)))

    cost = pl.CostEstimate(
        flops=2 * batch_p * (in_dim * hid_p + hid_p * 2 * z_p),
        transcendentals=2 * batch_p * z_p,
        bytes_accessed=(x_b.size * x_b.dtype.itemsize
                        + w1_p.size * w1_p.dtype.itemsize
                        + wh_p.size * wh_p.dtype.itemsize
                        + b1_p.size * 4 + bh_p.size * 4
                        + batch_p * 2 * z_p * 4),
    )

    packed = pl.pallas_call(
        functools.partial(_conditional_uniform_kernel, z_pad=z_p),
        out_shape=jax.ShapeDtypeStruct((batch_p, 2 * z_p), jnp.float32),
        grid=(n_steps,),
        in_specs=[
            pl.BlockSpec((tb, in_dim), lambda i: (i, 0)),        # x: streamed
            pl.BlockSpec((in_dim, hid_p), lambda i: (0, 0)),     # W1: resident
            pl.BlockSpec((1, hid_p), lambda i: (0, 0)),          # b1: resident
            pl.BlockSpec((hid_p, 2 * z_p), lambda i: (0, 0)),    # [Wc|Wr]
            pl.BlockSpec((1, 2 * z_p), lambda i: (0, 0)),        # [bc|br]
        ],
        out_specs=pl.BlockSpec((tb, 2 * z_p), lambda i: (i, 0)),
        compiler_params=pltpu.CompilerParams(
            dimension_semantics=("parallel",)),
        cost_estimate=cost,
    )(x_b, w1_p, b1_p, wh_p, bh_p)

    left = packed[:batch, :z_dim]
    right = packed[:batch, z_p:z_p + z_dim]
    return {'param:left': left, 'param:right': right}


class ConditionalUniformPallas:
    """Pads/fuses the weights ONCE; each __call__ only moves x + output."""

    def __init__(self, w1, b1, wc, bc, wr, br, *, block_batch=1024):
        in_dim, hidden = w1.shape
        z_dim = wc.shape[1]
        hid_p = _round_up(hidden, 128)
        z_p = _round_up(z_dim, 128)

        # MXU operands built directly in bf16 (no padded-f32 intermediate).
        self.w1_p = (jnp.zeros((in_dim, hid_p), MXU_DTYPE)
                     .at[:, :hidden].set(w1.astype(MXU_DTYPE)))
        self.b1_p = jnp.zeros((1, hid_p), jnp.float32).at[0, :hidden].set(b1)

        wh = jnp.zeros((hid_p, 2 * z_p), MXU_DTYPE)
        wh = wh.at[:hidden, :z_dim].set(wc.astype(MXU_DTYPE))
        wh = wh.at[:hidden, z_p:z_p + z_dim].set(wr.astype(MXU_DTYPE))
        self.wh_p = wh

        bh = jnp.zeros((1, 2 * z_p), jnp.float32)
        bh = bh.at[0, :z_dim].set(bc)
        bh = bh.at[0, z_p:z_p + z_dim].set(br)
        self.bh_p = bh

        self._fwd = jax.jit(functools.partial(
            _forward_padded, in_dim=in_dim, hid_p=hid_p, z_dim=z_dim, z_p=z_p,
            block_batch=block_batch))

    def __call__(self, x):
        return self._fwd(x, self.w1_p, self.b1_p, self.wh_p, self.bh_p)


def _ref_forward(x, w1, b1, wc, bc, wr, br):
    """Pure-JAX reference with the same bf16-MXU / f32-elementwise policy."""
    xd = x.astype(MXU_DTYPE)
    h = jnp.maximum(
        jnp.dot(xd, w1.astype(MXU_DTYPE),
                preferred_element_type=jnp.float32) + b1, 0.0)
    hd = h.astype(MXU_DTYPE)
    c = jnp.tanh(jnp.dot(hd, wc.astype(MXU_DTYPE),
                         preferred_element_type=jnp.float32) + bc)
    r = jax.nn.sigmoid(jnp.dot(hd, wr.astype(MXU_DTYPE),
                               preferred_element_type=jnp.float32) + br)
    return {'param:left': jnp.clip(c - r, -1.0, 1.0),
            'param:right': jnp.clip(c + r, -1.0, 1.0)}


if __name__ == "__main__":
    batch, in_dim, hidden, z_dim = 8, 32, 32, 16

    key = jax.random.PRNGKey(0)
    kx, k1, k2, k3, k4, k5, k6, kx2 = jax.random.split(key, 8)

    x = jax.random.normal(kx, (batch, in_dim), dtype=jnp.float32)

    # Deterministic parameter init (synthetic, not a checkpoint load).
    w1 = jax.random.normal(k1, (in_dim, hidden), dtype=jnp.float32) * 0.1
    b1 = jax.random.normal(k2, (hidden,), dtype=jnp.float32) * 0.1
    wc = jax.random.normal(k3, (hidden, z_dim), dtype=jnp.float32) * 0.1
    bc = jax.random.normal(k4, (z_dim,), dtype=jnp.float32) * 0.1
    wr = jax.random.normal(k5, (hidden, z_dim), dtype=jnp.float32) * 0.1
    br = jax.random.normal(k6, (z_dim,), dtype=jnp.float32) * 0.1

    model = ConditionalUniformPallas(w1, b1, wc, bc, wr, br)

    # Small batch (single grid step).
    out = model(x)
    jax.block_until_ready(out)
    ref = _ref_forward(x, w1, b1, wc, bc, wr, br)
    assert out['param:left'].shape == (batch, z_dim)
    assert out['param:right'].shape == (batch, z_dim)
    assert jnp.allclose(out['param:left'], ref['param:left'], atol=2e-3)
    assert jnp.allclose(out['param:right'], ref['param:right'], atol=2e-3)
    assert jnp.all(out['param:left'] <= out['param:right'] + 1e-6)

    # Larger, non-multiple-of-8 batch: exercises the >=2-step grid (megacore
    # path on v7x) and the batch-padding path.
    batch2 = 40
    x2 = jax.random.normal(kx2, (batch2, in_dim), dtype=jnp.float32)
    out2 = model(x2)
    jax.block_until_ready(out2)
    ref2 = _ref_forward(x2, w1, b1, wc, bc, wr, br)
    assert out2['param:left'].shape == (batch2, z_dim)
    assert jnp.allclose(out2['param:left'], ref2['param:left'], atol=2e-3)
    assert jnp.allclose(out2['param:right'], ref2['param:right'], atol=2e-3)
    assert jnp.all(out2['param:left'] <= out2['param:right'] + 1e-6)

    print("KERNEL_OK")
</pallas_src>

<mosaic_0001>
module attributes {stable_mosaic.version = 11 : i64} {
  func.func @_conditional_uniform_kernel(%arg0: i32, %arg1: memref<8x32xbf16, #tpu.memory_space<vmem>>, %arg2: memref<32x128xbf16, #tpu.memory_space<vmem>>, %arg3: memref<1x128xf32, #tpu.memory_space<vmem>>, %arg4: memref<128x256xbf16, #tpu.memory_space<vmem>>, %arg5: memref<1x256xf32, #tpu.memory_space<vmem>>, %arg6: memref<8x256xf32, #tpu.memory_space<vmem>>) attributes {dimension_semantics = [#tpu.dimension_semantics<parallel>], iteration_bounds = array<i64: 1>, scalar_prefetch = 0 : i64, scratch_operands = 0 : i64, tpu.core_type = #tpu.core_type<tc>, window_params = [{transform_indices = @transform_0, window_bounds = array<i64: 8, 32>}, {pipeline_mode = #tpu.pipeline_mode<synchronous>, transform_indices = @transform_1, window_bounds = array<i64: 32, 128>}, {pipeline_mode = #tpu.pipeline_mode<synchronous>, transform_indices = @transform_2, window_bounds = array<i64: 1, 128>}, {pipeline_mode = #tpu.pipeline_mode<synchronous>, transform_indices = @transform_3, window_bounds = array<i64: 128, 256>}, {pipeline_mode = #tpu.pipeline_mode<synchronous>, transform_indices = @transform_4, window_bounds = array<i64: 1, 256>}, {transform_indices = @transform_5, window_bounds = array<i64: 8, 256>}]} {
    %c0 = arith.constant 0 : index
    %c0_0 = arith.constant 0 : index
    %0 = vector.load %arg1[%c0, %c0_0] : memref<8x32xbf16, #tpu.memory_space<vmem>>, vector<8x32xbf16>
    %c0_1 = arith.constant 0 : index
    %c0_2 = arith.constant 0 : index
    %1 = vector.load %arg2[%c0_1, %c0_2] : memref<32x128xbf16, #tpu.memory_space<vmem>>, vector<32x128xbf16>
    %cst = arith.constant dense<0.000000e+00> : vector<8x128xf32>
    %2 = tpu.matmul %0, %1, %cst {dimension_numbers = #tpu.dot_dimension_numbers<[1], [0], [0], [1], [0, 0, 1, 1], [], []>} : vector<8x32xbf16>, vector<32x128xbf16>, vector<8x128xf32> -> vector<8x128xf32>
    %c0_3 = arith.constant 0 : index
    %c0_4 = arith.constant 0 : index
    %3 = vector.load %arg3[%c0_3, %c0_4] : memref<1x128xf32, #tpu.memory_space<vmem>>, vector<1x128xf32>
    %4 = vector.broadcast %3 : vector<1x128xf32> to vector<8x128xf32>
    %5 = arith.addf %2, %4 : vector<8x128xf32>
    %cst_5 = arith.constant 0.000000e+00 : f32
    %6 = vector.broadcast %cst_5 : f32 to vector<8x128xf32>
    %7 = arith.maximumf %5, %6 : vector<8x128xf32>
    %8 = arith.truncf %7 : vector<8x128xf32> to vector<8x128xbf16>
    %c0_6 = arith.constant 0 : index
    %c0_7 = arith.constant 0 : index
    %9 = vector.load %arg4[%c0_6, %c0_7] : memref<128x256xbf16, #tpu.memory_space<vmem>>, vector<128x256xbf16>
    %cst_8 = arith.constant dense<0.000000e+00> : vector<8x256xf32>
    %10 = tpu.matmul %8, %9, %cst_8 {dimension_numbers = #tpu.dot_dimension_numbers<[1], [0], [0], [1], [0, 0, 1, 1], [], []>} : vector<8x128xbf16>, vector<128x256xbf16>, vector<8x256xf32> -> vector<8x256xf32>
    %c0_9 = arith.constant 0 : index
    %c0_10 = arith.constant 0 : index
    %11 = vector.load %arg5[%c0_9, %c0_10] : memref<1x256xf32, #tpu.memory_space<vmem>>, vector<1x256xf32>
    %12 = vector.broadcast %11 : vector<1x256xf32> to vector<8x256xf32>
    %13 = arith.addf %10, %12 : vector<8x256xf32>
    %14 = vector.extract_strided_slice %13 {offsets = [0, 0], sizes = [8, 128], strides = [1, 1]} : vector<8x256xf32> to vector<8x128xf32>
    %15 = math.tanh %14 : vector<8x128xf32>
    %16 = vector.extract_strided_slice %13 {offsets = [0, 128], sizes = [8, 128], strides = [1, 1]} : vector<8x256xf32> to vector<8x128xf32>
    %17 = arith.negf %16 : vector<8x128xf32>
    %18 = math.exp %17 : vector<8x128xf32>
    %cst_11 = arith.constant 1.000000e+00 : f32
    %19 = vector.broadcast %cst_11 : f32 to vector<8x128xf32>
    %20 = arith.addf %19, %18 : vector<8x128xf32>
    %21 = arith.divf %19, %20 : vector<8x128xf32>
    %22 = arith.subf %15, %21 : vector<8x128xf32>
    %cst_12 = arith.constant -1.000000e+00 : f32
    %cst_13 = arith.constant 1.000000e+00 : f32
    %23 = vector.broadcast %cst_12 : f32 to vector<8x128xf32>
    %24 = arith.maximumf %23, %22 : vector<8x128xf32>
    %25 = vector.broadcast %cst_13 : f32 to vector<8x128xf32>
    %26 = arith.minimumf %25, %24 : vector<8x128xf32>
    %c0_14 = arith.constant 0 : index
    %c0_15 = arith.constant 0 : index
    %27 = vector.load %arg6[%c0_14, %c0_15] : memref<8x256xf32, #tpu.memory_space<vmem>>, vector<8x128xf32>
    tpu.vector_store %arg6[%c0_14, %c0_15], %26 {strides = array<i32>} : memref<8x256xf32, #tpu.memory_space<vmem>>, vector<8x128xf32>,
    %28 = arith.addf %15, %21 : vector<8x128xf32>
    %cst_16 = arith.constant -1.000000e+00 : f32
    %cst_17 = arith.constant 1.000000e+00 : f32
    %29 = vector.broadcast %cst_16 : f32 to vector<8x128xf32>
    %30 = arith.maximumf %29, %28 : vector<8x128xf32>
    %31 = vector.broadcast %cst_17 : f32 to vector<8x128xf32>
    %32 = arith.minimumf %31, %30 : vector<8x128xf32>
    %c0_18 = arith.constant 0 : index
    %c128 = arith.constant 128 : index
    %33 = vector.load %arg6[%c0_18, %c128] : memref<8x256xf32, #tpu.memory_space<vmem>>, vector<8x128xf32>
    tpu.vector_store %arg6[%c0_18, %c128], %32 {strides = array<i32>} : memref<8x256xf32, #tpu.memory_space<vmem>>, vector<8x128xf32>,
    return
  }
  func.func @transform_0(%arg0: i32) -> (i32, i32) {
    %c0_i32 = arith.constant 0 : i32
    %c0_i32_0 = arith.constant 0 : i32
    return %arg0, %c0_i32 : i32, i32
  }
  func.func @transform_1(%arg0: i32) -> (i32, i32) {
    %c0_i32 = arith.constant 0 : i32
    %c0_i32_0 = arith.constant 0 : i32
    %c0_i32_1 = arith.constant 0 : i32
    return %c0_i32, %c0_i32_0 : i32, i32
  }
  func.func @transform_2(%arg0: i32) -> (i32, i32) {
    %c0_i32 = arith.constant 0 : i32
    %c0_i32_0 = arith.constant 0 : i32
    %c0_i32_1 = arith.constant 0 : i32
    return %c0_i32, %c0_i32_0 : i32, i32
  }
  func.func @transform_3(%arg0: i32) -> (i32, i32) {
    %c0_i32 = arith.constant 0 : i32
    %c0_i32_0 = arith.constant 0 : i32
    %c0_i32_1 = arith.constant 0 : i32
    return %c0_i32, %c0_i32_0 : i32, i32
  }
  func.func @transform_4(%arg0: i32) -> (i32, i32) {
    %c0_i32 = arith.constant 0 : i32
    %c0_i32_0 = arith.constant 0 : i32
    %c0_i32_1 = arith.constant 0 : i32
    return %c0_i32, %c0_i32_0 : i32, i32
  }
  func.func @transform_5(%arg0: i32) -> (i32, i32) {
    %c0_i32 = arith.constant 0 : i32
    %c0_i32_0 = arith.constant 0 : i32
    return %arg0, %c0_i32 : i32, i32
  }
}

</mosaic_0001>

<llo_original>
// kernel: _forward_padded.1
$region0: #{_forward_padded.1}
  #allocation0 [shape = 'u32[]', space=smem, size = 0x4, offset = 0x4, fixed_abs, tag = 'smem constant byte address 0x4 - core index']
  #allocation1 [shape = 'u32[144,128]{1,0:T(1,128)}', space=vmem, size = 0x12000, scoped, tag = 'internal scratch']
  %s0 = inlined_call_operand.vmem [shape: bf16[8,32], index: 0, kind: input, shape index: {}]
  %s1 = inlined_call_operand.hbm [shape: bf16[32,128], index: 1, kind: input, shape index: {}]
  %s2 = inlined_call_operand.vmem [shape: f32[1,128], index: 2, kind: input, shape index: {}]
  %s3 = inlined_call_operand.hbm [shape: bf16[128,256], index: 3, kind: input, shape index: {}]
  %s4 = inlined_call_operand.vmem [shape: f32[1,256], index: 4, kind: input, shape index: {}]
  %s5 = inlined_call_operand.vmem [shape: f32[8,256], index: 5, kind: output, shape index: {}]
  %s6 = sld [smem:[#allocation0]]
  $region38: #{_forward_padded.1} parent=0
    _
  %s8 = ssub.s32 1, %s6
  %s9 = scalar_select 0, %s8, %s6
  $region1: #{_forward_padded.1} parent=0
    #allocation2 [shape = 'u8[8192]{0}', space=vmem, size = 0x2000, scoped, tag = 'input window, operand 1, single buffered']
    #allocation3 [shape = 's32[1]{0}', space=sflag, size = 0x4, scoped, tag = 'scoped memory for _forward_padded.1']
    #allocation4 [shape = 'u8[65536]{0}', space=vmem, size = 0x10000, scoped, tag = 'input window, operand 3, single buffered']
    #allocation5 [shape = 's32[1]{0}', space=sflag, size = 0x4, scoped, tag = 'scoped memory for _forward_padded.1']
    %10 = vsyncpa [#allocation3], 0
    %11 = vsyncpa [#allocation5], 0
    // Predicated region
    $region2: #{_forward_padded.1} parent=1 // pred_check
      _
    $region3: #{_forward_padded.1} parent=1 // pred_check_branch
      %13 = sbr.rel (0) target = $region5
    $region4: #{_forward_padded.1} parent=1 // pred_region
      _
    $region5: #{_forward_padded.1} parent=1 // pred_fallthru
      _
    // Predicated region
    $region6: #{_forward_padded.1} parent=1 // pred_check
      _
    $region7: #{_forward_padded.1} parent=1 // pred_check_branch
      %15 = sbr.rel (0) target = $region9
    $region8: #{_forward_padded.1} parent=1 // pred_region
      %s17 = ssub.s32 256, 256
      %18 = vsyncadd [#allocation3], %s17
      %s19 = sshll.u32 [#allocation2], 4
      %s20 = int_to_ptr.vmem [resolvable:$true] %s19
      %25 = dma.hbm_to_vmem [thread:$0]  %s1, 256, %s20, [#allocation3], 64, 64, 4
    $region9: #{_forward_padded.1} parent=1 // pred_fallthru
      _
    // Predicated region
    $region10: #{_forward_padded.1} parent=1 // pred_check
      _
    $region11: #{_forward_padded.1} parent=1 // pred_check_branch
      %27 = sbr.rel (0) target = $region13
    $region12: #{_forward_padded.1} parent=1 // pred_region
      _
    $region13: #{_forward_padded.1} parent=1 // pred_fallthru
      _
    // Predicated region
    $region14: #{_forward_padded.1} parent=1 // pred_check
      _
    $region15: #{_forward_padded.1} parent=1 // pred_check_branch
      %29 = sbr.rel (0) target = $region17
    $region16: #{_forward_padded.1} parent=1 // pred_region
      %s31 = ssub.s32 2048, 2048
      %32 = vsyncadd [#allocation5], %s31
      %s33 = sshll.u32 [#allocation4], 4
      %s34 = int_to_ptr.vmem [resolvable:$true] %s33
      %39 = dma.hbm_to_vmem [thread:$0]  %s3, 2048, %s34, [#allocation5], 128, 128, 8
    $region17: #{_forward_padded.1} parent=1 // pred_fallthru
      _
    // Predicated region
    $region18: #{_forward_padded.1} parent=1 // pred_check
      _
    $region19: #{_forward_padded.1} parent=1 // pred_check_branch
      %41 = sbr.rel (0) target = $region21
    $region20: #{_forward_padded.1} parent=1 // pred_region
      _
    $region21: #{_forward_padded.1} parent=1 // pred_fallthru
      _
    // Predicated region
    $region22: #{_forward_padded.1} parent=1 // pred_check
      _
    $region23: #{_forward_padded.1} parent=1 // pred_check_branch
      %43 = sbr.rel (0) target = $region25
    $region24: #{_forward_padded.1} parent=1 // pred_region
      %44 = dma.done [#allocation3], 256
    $region25: #{_forward_padded.1} parent=1 // pred_fallthru
      _
    // Predicated region
    $region26: #{_forward_padded.1} parent=1 // pred_check
      _
    $region27: #{_forward_padded.1} parent=1 // pred_check_branch
      %46 = sbr.rel (0) target = $region29
    $region28: #{_forward_padded.1} parent=1 // pred_region
      %47 = dma.done [#allocation5], 2048
    $region29: #{_forward_padded.1} parent=1 // pred_fallthru
      _
    %v49 = vld [vmem:[%s0] sm:$0xf]
    %v50 = vld [vmem:[#allocation2] sm:$0xf]
    %v51 = vld [vmem:[#allocation2 + $0x4] sm:$0xf]
    %v52 = vld [vmem:[#allocation2 + $0x8] sm:$0xf]
    %v53 = vld [vmem:[#allocation2 + $0xc] sm:$0xf]
    %v54 = vld [vmem:[%s2] sm:$0x1]
    %v56 = vlaneseq
    %v57 = vshrl.u32 %v56, 7
    %v58 = vsub.s32 0, %v57
    %v59 = vrot.slane %v54, %v58
    %v65 = vunpack.c.l.b16 %v50
    %v66 = vunpack.c.l.b16 %v51
    %v67 = vunpack.c.l.b16 %v52
    %v68 = vunpack.c.l.b16 %v53
    %v69 = vpack.c.b16 %v66, %v65
    %v70 = vpack.c.b16 %v68, %v67
    %vm73 = vcmask 261120
    %v75 = vsel %vm73, %v49, 0
    %77 = vmatprep.subr.bf16.mxu0 0
    %78 = vmatpush1.bf16.msra.mxu0 %v69
    %79 = vmatprep.subr.bf16.mxu0 0
    %80 = vmatpush1.bf16.msra.mxu0 %v70
    %81 = vmatprep.subr.bf16.mxu0 0
    %82 = vmatpush1.bf16.msra.mxu0 0
    %83 = vmatprep.subr.bf16.mxu0 0
    %84 = vmatpush1.bf16.msra.mxu0 0
    %85 = vmatprep.subr.bf16.mxu0 0
    %86 = vmatpush1.bf16.msra.mxu0 0
    %87 = vmatprep.subr.bf16.mxu0 0
    %88 = vmatpush1.bf16.msra.mxu0 0
    %89 = vmatprep.subr.bf16.mxu0 0
    %90 = vmatpush1.bf16.msra.mxu0 0
    %91 = vmatprep.subr.bf16.mxu0 0
    %92 = vmatpush1.bf16.msra.mxu0 0
    %93 = vmatprep.subr.bf16.mxu0 0
    %94 = vmatpush1.bf16.msra.mxu0 0
    %95 = vmatprep.subr.bf16.mxu0 0
    %96 = vmatpush1.bf16.msra.mxu0 0
    %97 = vmatprep.subr.bf16.mxu0 0
    %98 = vmatpush1.bf16.msra.mxu0 0
    %99 = vmatprep.subr.bf16.mxu0 0
    %100 = vmatpush1.bf16.msra.mxu0 0
    %101 = vmatprep.subr.bf16.mxu0 0
    %102 = vmatpush1.bf16.msra.mxu0 0
    %103 = vmatprep.subr.bf16.mxu0 0
    %104 = vmatpush1.bf16.msra.mxu0 0
    %105 = vmatprep.subr.bf16.mxu0 0
    %106 = vmatpush1.bf16.msra.mxu0 0
    %107 = vmatprep.subr.bf16.mxu0 0
    %108 = vmatpush1.bf16.msra.mxu0 0
    %109 = vmatprep.mubr.bf16.mxu0 0
    %110 = vmatmul.mubr.bf16.gmra.mrb[0].mxu0 %v75
    %v111 = vpop.f32.mrb[0].mxu0
    %v112 = vadd.f32 %v59, %v111
    %v113 = vpop.f32.mrb[0].mxu0
    %v114 = vpop.f32.mrb[0].mxu0
    %v115 = vpop.f32.mrb[0].mxu0
    %116 = vdwg.mxu0
    %v117 = vmax.f32 %v112, 0.0
    %v118 = vpack.c.bf16 %v117, %v117
    %v119 = vld [vmem:[#allocation4] sm:$0xff]
    %v120 = vld [vmem:[#allocation4 + $0x8] sm:$0xff]
    %v121 = vld [vmem:[#allocation4 + $0x10] sm:$0xff]
    %v122 = vld [vmem:[#allocation4 + $0x18] sm:$0xff]
    %v123 = vld [vmem:[#allocation4 + $0x20] sm:$0xff]
    %v124 = vld [vmem:[#allocation4 + $0x28] sm:$0xff]
    %v125 = vld [vmem:[#allocation4 + $0x30] sm:$0xff]
    %v126 = vld [vmem:[#allocation4 + $0x38] sm:$0xff]
    %v127 = vld [vmem:[#allocation4 + $0x40] sm:$0xff]
    %v128 = vld [vmem:[#allocation4 + $0x48] sm:$0xff]
    %v129 = vld [vmem:[#allocation4 + $0x50] sm:$0xff]
    %v130 = vld [vmem:[#allocation4 + $0x58] sm:$0xff]
    %v131 = vld [vmem:[#allocation4 + $0x60] sm:$0xff]
    %v132 = vld [vmem:[#allocation4 + $0x68] sm:$0xff]
    %v133 = vld [vmem:[#allocation4 + $0x70] sm:$0xff]
    %v134 = vld [vmem:[#allocation4 + $0x78] sm:$0xff]
    %v135 = vld [vmem:[%s4] sm:$0x3]
    %v137 = vlaneseq
    %v138 = vshrl.u32 %v137, 7
    %v139 = vsub.s32 0, %v138
    %v140 = vrot.slane %v135, %v139
    %v141 = vlaneseq
    %v142 = vshrl.u32 %v141, 7
    %v143 = vsub.s32 1, %v142
    %v144 = vrot.slane %v135, %v143
    %v163 = vunpack.c.l.b16 %v119
    %v164 = vunpack.c.h.b16 %v119
    %v165 = vunpack.c.l.b16 %v120
    %v166 = vunpack.c.h.b16 %v120
    %v167 = vunpack.c.l.b16 %v121
    %v168 = vunpack.c.h.b16 %v121
    %v169 = vunpack.c.l.b16 %v122
    %v170 = vunpack.c.h.b16 %v122
    %v171 = vunpack.c.l.b16 %v123
    %v172 = vunpack.c.h.b16 %v123
    %v173 = vunpack.c.l.b16 %v124
    %v174 = vunpack.c.h.b16 %v124
    %v175 = vunpack.c.l.b16 %v125
    %v176 = vunpack.c.h.b16 %v125
    %v177 = vunpack.c.l.b16 %v126
    %v178 = vunpack.c.h.b16 %v126
    %v179 = vunpack.c.l.b16 %v127
    %v180 = vunpack.c.h.b16 %v127
    %v181 = vunpack.c.l.b16 %v128
    %v182 = vunpack.c.h.b16 %v128
    %v183 = vunpack.c.l.b16 %v129
    %v184 = vunpack.c.h.b16 %v129
    %v185 = vunpack.c.l.b16 %v130
    %v186 = vunpack.c.h.b16 %v130
    %v187 = vunpack.c.l.b16 %v131
    %v188 = vunpack.c.h.b16 %v131
    %v189 = vunpack.c.l.b16 %v132
    %v190 = vunpack.c.h.b16 %v132
    %v191 = vunpack.c.l.b16 %v133
    %v192 = vunpack.c.h.b16 %v133
    %v193 = vunpack.c.l.b16 %v134
    %v194 = vunpack.c.h.b16 %v134
    %v195 = vpack.c.b16 %v165, %v163
    %v196 = vpack.c.b16 %v166, %v164
    %v197 = vpack.c.b16 %v169, %v167
    %v198 = vpack.c.b16 %v170, %v168
    %v199 = vpack.c.b16 %v173, %v171
    %v200 = vpack.c.b16 %v174, %v172
    %v201 = vpack.c.b16 %v177, %v175
    %v202 = vpack.c.b16 %v178, %v176
    %v203 = vpack.c.b16 %v181, %v179
    %v204 = vpack.c.b16 %v182, %v180
    %v205 = vpack.c.b16 %v185, %v183
    %v206 = vpack.c.b16 %v186, %v184
    %v207 = vpack.c.b16 %v189, %v187
    %v208 = vpack.c.b16 %v190, %v188
    %v209 = vpack.c.b16 %v193, %v191
    %v210 = vpack.c.b16 %v194, %v192
    %227 = vmatprep.subr.bf16.mxu0 %v196
    %228 = vmatpush1.bf16.msra.mxu0 %v195
    %229 = vmatprep.subr.bf16.mxu0 %v198
    %230 = vmatpush1.bf16.msra.mxu0 %v197
    %231 = vmatprep.subr.bf16.mxu0 %v200
    %232 = vmatpush1.bf16.msra.mxu0 %v199
    %233 = vmatprep.subr.bf16.mxu0 %v202
    %234 = vmatpush1.bf16.msra.mxu0 %v201
    %235 = vmatprep.subr.bf16.mxu0 %v204
    %236 = vmatpush1.bf16.msra.mxu0 %v203
    %237 = vmatprep.subr.bf16.mxu0 %v206
    %238 = vmatpush1.bf16.msra.mxu0 %v205
    %239 = vmatprep.subr.bf16.mxu0 %v208
    %240 = vmatpush1.bf16.msra.mxu0 %v207
    %241 = vmatprep.subr.bf16.mxu0 %v210
    %242 = vmatpush1.bf16.msra.mxu0 %v209
    %243 = vmatprep.subr.bf16.mxu0 0
    %244 = vmatpush1.bf16.msra.mxu0 0
    %245 = vmatprep.subr.bf16.mxu0 0
    %246 = vmatpush1.bf16.msra.mxu0 0
    %247 = vmatprep.subr.bf16.mxu0 0
    %248 = vmatpush1.bf16.msra.mxu0 0
    %249 = vmatprep.subr.bf16.mxu0 0
    %250 = vmatpush1.bf16.msra.mxu0 0
    %251 = vmatprep.subr.bf16.mxu0 0
    %252 = vmatpush1.bf16.msra.mxu0 0
    %253 = vmatprep.subr.bf16.mxu0 0
    %254 = vmatpush1.bf16.msra.mxu0 0
    %255 = vmatprep.subr.bf16.mxu0 0
    %256 = vmatpush1.bf16.msra.mxu0 0
    %257 = vmatprep.subr.bf16.mxu0 0
    %258 = vmatpush1.bf16.msra.mxu0 0
    %259 = vmatprep.mubr.bf16.mxu0 0
    %260 = vmatmul.mubr.bf16.gmra.mrb[0].mxu0 %v118
    %v261 = vpop.f32.mrb[0].mxu0
    %v262 = vadd.f32 %v140, %v261
    %v263 = vpop.f32.mrb[0].mxu0
    %v264 = vadd.f32 %v144, %v263
    %v265 = vpop.f32.mrb[0].mxu0
    %v266 = vpop.f32.mrb[0].mxu0
    %267 = vdwg.mxu0
    %v268 = vtanh.pop %v262
    %v269 = vxor.u32 %v264, 2147483648
    %v270 = vmul.f32 %v269, 1.442695
    %v271 = vpow.pop %v270
    %v272 = vadd.f32 %v271, 1.0
    %v273 = vrcp.pop %v272
    %v274 = vmul.f32 1.0, %v273
    %v275 = vsub.f32 %v268, %v274
    %v276 = vmax.f32 %v275, -1.0
    %v277 = vmin.f32 %v276, 1.0
    %278 = vst [vmem:[%s5] sm:$0xff] %v277
    %v279 = vadd.f32 %v268, %v274
    %v280 = vmax.f32 %v279, -1.0
    %v281 = vmin.f32 %v280, 1.0
    %282 = vst [vmem:[%s5 + $0x8] sm:$0xff] %v281
    // Predicated region
    $region30: #{_forward_padded.1} parent=1 // pred_check
      _
    $region31: #{_forward_padded.1} parent=1 // pred_check_branch
      %284 = sbr.rel (0) target = $region33
    $region32: #{_forward_padded.1} parent=1 // pred_region
      _
    $region33: #{_forward_padded.1} parent=1 // pred_fallthru
      _
    // Predicated region
    $region34: #{_forward_padded.1} parent=1 // pred_check
      _
    $region35: #{_forward_padded.1} parent=1 // pred_check_branch
      %286 = sbr.rel (0) target = $region37
    $region36: #{_forward_padded.1} parent=1 // pred_region
      _
    $region37: #{_forward_padded.1} parent=1 // pred_fallthru
      _
    %287 = vsyncpa [#allocation3], 1
    %288 = vsyncpa [#allocation5], 1

</llo_original>
